<compile_context>
chip_gen: v6e
topology: v6e:2x2x1
jax: 0.10.0
libtpu: 0.0.40
codegen_flags: <defaults>
</compile_context>

<pallas_src>
import jax
import jax.numpy as jnp
from jax import lax
from jax.experimental import pallas as pl
from jax.experimental.pallas import tpu as pltpu

NUM_INPUT = 2
NUM_HIDDEN = 100
NUM_OUT = 1

LANES = 128
SUBLANES = 8

H_PAD = 128   # padded hidden width
K_PAD = 128   # padded concat width for [h | x | 0]; requires H + I <= 128


def _round_up(x, m):
    return (x + m - 1) // m * m


def _make_rnn_seq_kernel(seq):
    """Whole TBPTT window runs in one kernel invocation (grid=(1,))."""

    def kernel(x_ref, h0_ref, w_ref, b_ref, h_all_ref):
        # x_ref:     (seq, B_pad, K_PAD) f32   x_t in lanes [H, H+I), zeros elsewhere
        # h0_ref:    (B_pad, H_PAD)      f32   initial hidden state (zero-padded)
        # w_ref:     (K_PAD, H_PAD)      bf16  rows [0,H)=W_hh^T, [H,H+I)=W_ih^T, rest 0
        # b_ref:     (1, H_PAD)          f32   b_ih + b_hh, zero beyond H
        # h_all_ref: (seq, B_pad, H_PAD) f32   hidden trajectory (output)
        w = w_ref[...]          # hoisted: loaded once, stays in vregs/VMEM
        b = b_ref[...]

        def step(t, h):
            # "Concat" [h | x_t] via disjoint-lane add: h lives in lanes [0,H),
            # x_t in lanes [H, H+I); both zero elsewhere.
            a = h + x_ref[t]
            # Single fused 128x128 MXU matmul; bf16 operands, f32 accumulate.
            pre = jnp.dot(a.astype(jnp.bfloat16), w,
                          preferred_element_type=jnp.float32) + b
            h_new = jnp.tanh(pre)          # tanh(0)=0 keeps padded lanes zero
            h_all_ref[t] = h_new           # lane-dense (B_pad,128) row store
            return h_new

        # Hidden state carried as a loop value (vregs); seq is small & static
        # so fully unroll for LLO scheduling visibility.
        # NOTE: for long sequences, chunk instead: grid=(ceil(seq/T),) with a
        # (T, B_pad, K_PAD) x block and an inner loop over T.
        lax.fori_loop(0, seq, step, h0_ref[...], unroll=True)

    return kernel


def rnn_tbptt_forward_seq(xs, h0, kparams):
    """Fused forward over a sequence.

    xs: (seq, B, I) float32, h0: (B, H) float32.
    Returns (outputs: (seq, B, 1), final hidden state: (B, H)).
    """
    seq, B, I = xs.shape
    H = h0.shape[1]
    assert H + I <= K_PAD and H <= H_PAD
    B_pad = _round_up(max(B, 1), SUBLANES)

    w_cat, b_cat, w_lin, b_lin = kparams

    # Layout plumbing: one pad op per array (no zeros + scatter).
    x_slab = jnp.pad(xs.astype(jnp.float32),
                     ((0, 0), (0, B_pad - B), (H, K_PAD - H - I)))
    h0_pad = jnp.pad(h0.astype(jnp.float32),
                     ((0, B_pad - B), (0, H_PAD - H)))

    h_all = pl.pallas_call(
        _make_rnn_seq_kernel(seq),
        out_shape=jax.ShapeDtypeStruct((seq, B_pad, H_PAD), jnp.float32),
        grid=(1,),
        in_specs=[
            pl.BlockSpec((seq, B_pad, K_PAD), lambda i: (0, 0, 0)),  # x slab (resident)
            pl.BlockSpec((B_pad, H_PAD), lambda i: (0, 0)),          # h0
            pl.BlockSpec((K_PAD, H_PAD), lambda i: (0, 0)),          # fused weights (bf16)
            pl.BlockSpec((1, H_PAD), lambda i: (0, 0)),              # fused bias
        ],
        out_specs=pl.BlockSpec((seq, B_pad, H_PAD), lambda i: (0, 0, 0)),
        compiler_params=pltpu.CompilerParams(
            dimension_semantics=("arbitrary",),       # single sequential step
            vmem_limit_bytes=32 * 1024 * 1024),       # explicit; safe on v5e/v6e/v7x
    )(x_slab, h0_pad, w_cat, b_cat)

    # Readout deferred to ONE batched matmul instead of per-step reduce+store.
    h_valid = h_all[:, :B, :H]                                  # (seq, B, H)
    outs = jnp.einsum('tbh,oh->tbo', h_valid, w_lin) + b_lin    # (seq, B, 1)
    h_final = h_valid[seq - 1]                                  # (B, H)
    return outs, h_final


def rnn_tbptt_forward(x, h, kparams):
    """Single-step forward(input, state) -> (output, new_state)."""
    outs, h_new = rnn_tbptt_forward_seq(x[None], h, kparams)
    return outs[0], h_new


def init_params(key, num_input=NUM_INPUT, num_hidden=NUM_HIDDEN):
    """PyTorch-layout weights, U(-1/sqrt(H), 1/sqrt(H))."""
    ks = jax.random.split(key, 6)
    bound = 1.0 / jnp.sqrt(jnp.float32(num_hidden))
    u = lambda k, shape: jax.random.uniform(
        k, shape, jnp.float32, minval=-bound, maxval=bound)
    w_ih = u(ks[0], (num_hidden, num_input))     # (H, I)
    w_hh = u(ks[1], (num_hidden, num_hidden))    # (H, H)
    b_ih = u(ks[2], (num_hidden,))
    b_hh = u(ks[3], (num_hidden,))
    w_lin = u(ks[4], (NUM_OUT, num_hidden))      # (1, H)
    b_lin = u(ks[5], (NUM_OUT,))
    return (w_ih, w_hh, b_ih, b_hh, w_lin, b_lin)


def pack_params(raw, num_input=NUM_INPUT, num_hidden=NUM_HIDDEN):
    """Build padded/fused kernel parameters from PyTorch-layout weights."""
    w_ih, w_hh, b_ih, b_hh, w_lin, b_lin = raw
    H, I = num_hidden, num_input

    w_cat = jnp.zeros((K_PAD, H_PAD), jnp.float32)
    w_cat = w_cat.at[:H, :H].set(w_hh.T)          # recurrent rows
    w_cat = w_cat.at[H:H + I, :H].set(w_ih.T)     # input rows
    w_cat = w_cat.astype(jnp.bfloat16)            # MXU operand stored as bf16

    b_cat = jnp.zeros((1, H_PAD), jnp.float32)
    b_cat = b_cat.at[0, :H].set(b_ih + b_hh)      # pre-summed bias (f32)

    return (w_cat, b_cat,
            w_lin.astype(jnp.float32), b_lin.astype(jnp.float32))


def reference_forward_seq(xs, h0, raw):
    """Pure-JAX step-by-step reference (mirrors the PyTorch forward)."""
    w_ih, w_hh, b_ih, b_hh, w_lin, b_lin = raw
    h = h0
    outs = []
    for t in range(xs.shape[0]):
        h = jnp.tanh(xs[t] @ w_ih.T + b_ih + h @ w_hh.T + b_hh)
        outs.append(h @ w_lin.T + b_lin)
    return jnp.stack(outs), h


# TODO(synk): the TBPTT training machinery (SGD, MSELoss, retained-graph
# backward over the k2 window) is autograd/optimizer bookkeeping, not part of
# the forward pass, and is not ported.

if __name__ == "__main__":
    key = jax.random.PRNGKey(0)
    pkey, xkey = jax.random.split(key)

    raw = init_params(pkey)
    kparams = pack_params(raw)

    batch, seq = 1, 8                                   # module uses batch=1
    xs = jax.random.normal(xkey, (seq, batch, NUM_INPUT), dtype=jnp.float32)
    h0 = jnp.zeros((batch, NUM_HIDDEN), dtype=jnp.float32)

    fused = jax.jit(rnn_tbptt_forward_seq)
    outs, h_final = fused(xs, h0, kparams)
    outs = jax.block_until_ready(outs)
    h_final = jax.block_until_ready(h_final)

    outs_ref, h_ref = reference_forward_seq(xs, h0, raw)

    assert outs.shape == (seq, batch, NUM_OUT)
    assert h_final.shape == (batch, NUM_HIDDEN)
    # bf16 MXU operands with f32 accumulation -> tolerance loosened vs pure f32
    # (observed error ~1e-3 at these magnitudes; 2e-2 gives ~10x margin).
    assert bool(jnp.allclose(outs, outs_ref, atol=2e-2, rtol=2e-2))
    assert bool(jnp.allclose(h_final, h_ref, atol=2e-2, rtol=2e-2))

    # Single-step path matching the module's forward(input, state) signature.
    out1, h1 = rnn_tbptt_forward(xs[0], h0, kparams)
    out1 = jax.block_until_ready(out1)
    outs_ref1, h_ref1 = reference_forward_seq(xs[:1], h0, raw)
    assert bool(jnp.allclose(out1, outs_ref1[0], atol=2e-2, rtol=2e-2))
    assert bool(jnp.allclose(h1, h_ref1, atol=2e-2, rtol=2e-2))

    print("KERNEL_OK")
</pallas_src>

<mosaic_0001>
module attributes {stable_mosaic.version = 11 : i64} {
  func.func @kernel(%arg0: i32, %arg1: memref<8x8x128xf32, #tpu.memory_space<vmem>>, %arg2: memref<8x128xf32, #tpu.memory_space<vmem>>, %arg3: memref<128x128xbf16, #tpu.memory_space<vmem>>, %arg4: memref<1x128xf32, #tpu.memory_space<vmem>>, %arg5: memref<8x8x128xf32, #tpu.memory_space<vmem>>) attributes {dimension_semantics = [#tpu.dimension_semantics<arbitrary>], iteration_bounds = array<i64: 1>, scalar_prefetch = 0 : i64, scratch_operands = 0 : i64, tpu.core_type = #tpu.core_type<tc>, window_params = [{pipeline_mode = #tpu.pipeline_mode<synchronous>, transform_indices = @transform_0, window_bounds = array<i64: 8, 8, 128>}, {pipeline_mode = #tpu.pipeline_mode<synchronous>, transform_indices = @transform_1, window_bounds = array<i64: 8, 128>}, {pipeline_mode = #tpu.pipeline_mode<synchronous>, transform_indices = @transform_2, window_bounds = array<i64: 128, 128>}, {pipeline_mode = #tpu.pipeline_mode<synchronous>, transform_indices = @transform_3, window_bounds = array<i64: 1, 128>}, {pipeline_mode = #tpu.pipeline_mode<synchronous>, transform_indices = @transform_4, window_bounds = array<i64: 8, 8, 128>}]} {
    %c0 = arith.constant 0 : index
    %c0_0 = arith.constant 0 : index
    %0 = vector.load %arg3[%c0, %c0_0] : memref<128x128xbf16, #tpu.memory_space<vmem>>, vector<128x128xbf16>
    %c0_1 = arith.constant 0 : index
    %c0_2 = arith.constant 0 : index
    %1 = vector.load %arg4[%c0_1, %c0_2] : memref<1x128xf32, #tpu.memory_space<vmem>>, vector<1x128xf32>
    %c0_3 = arith.constant 0 : index
    %c0_4 = arith.constant 0 : index
    %2 = vector.load %arg2[%c0_3, %c0_4] : memref<8x128xf32, #tpu.memory_space<vmem>>, vector<8x128xf32>
    %c0_i32 = arith.constant 0 : i32
    %3 = arith.index_cast %c0_i32 : i32 to index
    %c0_5 = arith.constant 0 : index
    %c0_6 = arith.constant 0 : index
    %4 = vector.load %arg1[%3, %c0_5, %c0_6] : memref<8x8x128xf32, #tpu.memory_space<vmem>>, vector<1x8x128xf32>
    %5 = vector.shape_cast %4 : vector<1x8x128xf32> to vector<8x128xf32>
    %6 = arith.addf %2, %5 : vector<8x128xf32>
    %7 = arith.truncf %6 : vector<8x128xf32> to vector<8x128xbf16>
    %cst = arith.constant dense<0.000000e+00> : vector<8x128xf32>
    %8 = tpu.matmul %7, %0, %cst {dimension_numbers = #tpu.dot_dimension_numbers<[1], [0], [0], [1], [0, 0, 1, 1], [], []>} : vector<8x128xbf16>, vector<128x128xbf16>, vector<8x128xf32> -> vector<8x128xf32>
    %9 = vector.broadcast %1 : vector<1x128xf32> to vector<8x128xf32>
    %10 = arith.addf %8, %9 : vector<8x128xf32>
    %11 = math.tanh %10 : vector<8x128xf32>
    %12 = arith.index_cast %c0_i32 : i32 to index
    %c0_7 = arith.constant 0 : index
    %c0_8 = arith.constant 0 : index
    %13 = vector.load %arg5[%12, %c0_7, %c0_8] : memref<8x8x128xf32, #tpu.memory_space<vmem>>, vector<1x8x128xf32>
    %14 = vector.shape_cast %13 : vector<1x8x128xf32> to vector<8x128xf32>
    %15 = vector.shape_cast %11 : vector<8x128xf32> to vector<1x8x128xf32>
    tpu.vector_store %arg5[%12, %c0_7, %c0_8], %15 {strides = array<i32>} : memref<8x8x128xf32, #tpu.memory_space<vmem>>, vector<1x8x128xf32>,
    %c1_i32 = arith.constant 1 : i32
    %16 = arith.index_cast %c1_i32 : i32 to index
    %c0_9 = arith.constant 0 : index
    %c0_10 = arith.constant 0 : index
    %17 = vector.load %arg1[%16, %c0_9, %c0_10] : memref<8x8x128xf32, #tpu.memory_space<vmem>>, vector<1x8x128xf32>
    %18 = vector.shape_cast %17 : vector<1x8x128xf32> to vector<8x128xf32>
    %19 = arith.addf %11, %18 : vector<8x128xf32>
    %20 = arith.truncf %19 : vector<8x128xf32> to vector<8x128xbf16>
    %cst_11 = arith.constant dense<0.000000e+00> : vector<8x128xf32>
    %21 = tpu.matmul %20, %0, %cst_11 {dimension_numbers = #tpu.dot_dimension_numbers<[1], [0], [0], [1], [0, 0, 1, 1], [], []>} : vector<8x128xbf16>, vector<128x128xbf16>, vector<8x128xf32> -> vector<8x128xf32>
    %22 = vector.broadcast %1 : vector<1x128xf32> to vector<8x128xf32>
    %23 = arith.addf %21, %22 : vector<8x128xf32>
    %24 = math.tanh %23 : vector<8x128xf32>
    %25 = arith.index_cast %c1_i32 : i32 to index
    %c0_12 = arith.constant 0 : index
    %c0_13 = arith.constant 0 : index
    %26 = vector.load %arg5[%25, %c0_12, %c0_13] : memref<8x8x128xf32, #tpu.memory_space<vmem>>, vector<1x8x128xf32>
    %27 = vector.shape_cast %26 : vector<1x8x128xf32> to vector<8x128xf32>
    %28 = vector.shape_cast %24 : vector<8x128xf32> to vector<1x8x128xf32>
    tpu.vector_store %arg5[%25, %c0_12, %c0_13], %28 {strides = array<i32>} : memref<8x8x128xf32, #tpu.memory_space<vmem>>, vector<1x8x128xf32>,
    %c2_i32 = arith.constant 2 : i32
    %29 = arith.index_cast %c2_i32 : i32 to index
    %c0_14 = arith.constant 0 : index
    %c0_15 = arith.constant 0 : index
    %30 = vector.load %arg1[%29, %c0_14, %c0_15] : memref<8x8x128xf32, #tpu.memory_space<vmem>>, vector<1x8x128xf32>
    %31 = vector.shape_cast %30 : vector<1x8x128xf32> to vector<8x128xf32>
    %32 = arith.addf %24, %31 : vector<8x128xf32>
    %33 = arith.truncf %32 : vector<8x128xf32> to vector<8x128xbf16>
    %cst_16 = arith.constant dense<0.000000e+00> : vector<8x128xf32>
    %34 = tpu.matmul %33, %0, %cst_16 {dimension_numbers = #tpu.dot_dimension_numbers<[1], [0], [0], [1], [0, 0, 1, 1], [], []>} : vector<8x128xbf16>, vector<128x128xbf16>, vector<8x128xf32> -> vector<8x128xf32>
    %35 = vector.broadcast %1 : vector<1x128xf32> to vector<8x128xf32>
    %36 = arith.addf %34, %35 : vector<8x128xf32>
    %37 = math.tanh %36 : vector<8x128xf32>
    %38 = arith.index_cast %c2_i32 : i32 to index
    %c0_17 = arith.constant 0 : index
    %c0_18 = arith.constant 0 : index
    %39 = vector.load %arg5[%38, %c0_17, %c0_18] : memref<8x8x128xf32, #tpu.memory_space<vmem>>, vector<1x8x128xf32>
    %40 = vector.shape_cast %39 : vector<1x8x128xf32> to vector<8x128xf32>
    %41 = vector.shape_cast %37 : vector<8x128xf32> to vector<1x8x128xf32>
    tpu.vector_store %arg5[%38, %c0_17, %c0_18], %41 {strides = array<i32>} : memref<8x8x128xf32, #tpu.memory_space<vmem>>, vector<1x8x128xf32>,
    %c3_i32 = arith.constant 3 : i32
    %42 = arith.index_cast %c3_i32 : i32 to index
    %c0_19 = arith.constant 0 : index
    %c0_20 = arith.constant 0 : index
    %43 = vector.load %arg1[%42, %c0_19, %c0_20] : memref<8x8x128xf32, #tpu.memory_space<vmem>>, vector<1x8x128xf32>
    %44 = vector.shape_cast %43 : vector<1x8x128xf32> to vector<8x128xf32>
    %45 = arith.addf %37, %44 : vector<8x128xf32>
    %46 = arith.truncf %45 : vector<8x128xf32> to vector<8x128xbf16>
    %cst_21 = arith.constant dense<0.000000e+00> : vector<8x128xf32>
    %47 = tpu.matmul %46, %0, %cst_21 {dimension_numbers = #tpu.dot_dimension_numbers<[1], [0], [0], [1], [0, 0, 1, 1], [], []>} : vector<8x128xbf16>, vector<128x128xbf16>, vector<8x128xf32> -> vector<8x128xf32>
    %48 = vector.broadcast %1 : vector<1x128xf32> to vector<8x128xf32>
    %49 = arith.addf %47, %48 : vector<8x128xf32>
    %50 = math.tanh %49 : vector<8x128xf32>
    %51 = arith.index_cast %c3_i32 : i32 to index
    %c0_22 = arith.constant 0 : index
    %c0_23 = arith.constant 0 : index
    %52 = vector.load %arg5[%51, %c0_22, %c0_23] : memref<8x8x128xf32, #tpu.memory_space<vmem>>, vector<1x8x128xf32>
    %53 = vector.shape_cast %52 : vector<1x8x128xf32> to vector<8x128xf32>
    %54 = vector.shape_cast %50 : vector<8x128xf32> to vector<1x8x128xf32>
    tpu.vector_store %arg5[%51, %c0_22, %c0_23], %54 {strides = array<i32>} : memref<8x8x128xf32, #tpu.memory_space<vmem>>, vector<1x8x128xf32>,
    %c4_i32 = arith.constant 4 : i32
    %55 = arith.index_cast %c4_i32 : i32 to index
    %c0_24 = arith.constant 0 : index
    %c0_25 = arith.constant 0 : index
    %56 = vector.load %arg1[%55, %c0_24, %c0_25] : memref<8x8x128xf32, #tpu.memory_space<vmem>>, vector<1x8x128xf32>
    %57 = vector.shape_cast %56 : vector<1x8x128xf32> to vector<8x128xf32>
    %58 = arith.addf %50, %57 : vector<8x128xf32>
    %59 = arith.truncf %58 : vector<8x128xf32> to vector<8x128xbf16>
    %cst_26 = arith.constant dense<0.000000e+00> : vector<8x128xf32>
    %60 = tpu.matmul %59, %0, %cst_26 {dimension_numbers = #tpu.dot_dimension_numbers<[1], [0], [0], [1], [0, 0, 1, 1], [], []>} : vector<8x128xbf16>, vector<128x128xbf16>, vector<8x128xf32> -> vector<8x128xf32>
    %61 = vector.broadcast %1 : vector<1x128xf32> to vector<8x128xf32>
    %62 = arith.addf %60, %61 : vector<8x128xf32>
    %63 = math.tanh %62 : vector<8x128xf32>
    %64 = arith.index_cast %c4_i32 : i32 to index
    %c0_27 = arith.constant 0 : index
    %c0_28 = arith.constant 0 : index
    %65 = vector.load %arg5[%64, %c0_27, %c0_28] : memref<8x8x128xf32, #tpu.memory_space<vmem>>, vector<1x8x128xf32>
    %66 = vector.shape_cast %65 : vector<1x8x128xf32> to vector<8x128xf32>
    %67 = vector.shape_cast %63 : vector<8x128xf32> to vector<1x8x128xf32>
    tpu.vector_store %arg5[%64, %c0_27, %c0_28], %67 {strides = array<i32>} : memref<8x8x128xf32, #tpu.memory_space<vmem>>, vector<1x8x128xf32>,
    %c5_i32 = arith.constant 5 : i32
    %68 = arith.index_cast %c5_i32 : i32 to index
    %c0_29 = arith.constant 0 : index
    %c0_30 = arith.constant 0 : index
    %69 = vector.load %arg1[%68, %c0_29, %c0_30] : memref<8x8x128xf32, #tpu.memory_space<vmem>>, vector<1x8x128xf32>
    %70 = vector.shape_cast %69 : vector<1x8x128xf32> to vector<8x128xf32>
    %71 = arith.addf %63, %70 : vector<8x128xf32>
    %72 = arith.truncf %71 : vector<8x128xf32> to vector<8x128xbf16>
    %cst_31 = arith.constant dense<0.000000e+00> : vector<8x128xf32>
    %73 = tpu.matmul %72, %0, %cst_31 {dimension_numbers = #tpu.dot_dimension_numbers<[1], [0], [0], [1], [0, 0, 1, 1], [], []>} : vector<8x128xbf16>, vector<128x128xbf16>, vector<8x128xf32> -> vector<8x128xf32>
    %74 = vector.broadcast %1 : vector<1x128xf32> to vector<8x128xf32>
    %75 = arith.addf %73, %74 : vector<8x128xf32>
    %76 = math.tanh %75 : vector<8x128xf32>
    %77 = arith.index_cast %c5_i32 : i32 to index
    %c0_32 = arith.constant 0 : index
    %c0_33 = arith.constant 0 : index
    %78 = vector.load %arg5[%77, %c0_32, %c0_33] : memref<8x8x128xf32, #tpu.memory_space<vmem>>, vector<1x8x128xf32>
    %79 = vector.shape_cast %78 : vector<1x8x128xf32> to vector<8x128xf32>
    %80 = vector.shape_cast %76 : vector<8x128xf32> to vector<1x8x128xf32>
    tpu.vector_store %arg5[%77, %c0_32, %c0_33], %80 {strides = array<i32>} : memref<8x8x128xf32, #tpu.memory_space<vmem>>, vector<1x8x128xf32>,
    %c6_i32 = arith.constant 6 : i32
    %81 = arith.index_cast %c6_i32 : i32 to index
    %c0_34 = arith.constant 0 : index
    %c0_35 = arith.constant 0 : index
    %82 = vector.load %arg1[%81, %c0_34, %c0_35] : memref<8x8x128xf32, #tpu.memory_space<vmem>>, vector<1x8x128xf32>
    %83 = vector.shape_cast %82 : vector<1x8x128xf32> to vector<8x128xf32>
    %84 = arith.addf %76, %83 : vector<8x128xf32>
    %85 = arith.truncf %84 : vector<8x128xf32> to vector<8x128xbf16>
    %cst_36 = arith.constant dense<0.000000e+00> : vector<8x128xf32>
    %86 = tpu.matmul %85, %0, %cst_36 {dimension_numbers = #tpu.dot_dimension_numbers<[1], [0], [0], [1], [0, 0, 1, 1], [], []>} : vector<8x128xbf16>, vector<128x128xbf16>, vector<8x128xf32> -> vector<8x128xf32>
    %87 = vector.broadcast %1 : vector<1x128xf32> to vector<8x128xf32>
    %88 = arith.addf %86, %87 : vector<8x128xf32>
    %89 = math.tanh %88 : vector<8x128xf32>
    %90 = arith.index_cast %c6_i32 : i32 to index
    %c0_37 = arith.constant 0 : index
    %c0_38 = arith.constant 0 : index
    %91 = vector.load %arg5[%90, %c0_37, %c0_38] : memref<8x8x128xf32, #tpu.memory_space<vmem>>, vector<1x8x128xf32>
    %92 = vector.shape_cast %91 : vector<1x8x128xf32> to vector<8x128xf32>
    %93 = vector.shape_cast %89 : vector<8x128xf32> to vector<1x8x128xf32>
    tpu.vector_store %arg5[%90, %c0_37, %c0_38], %93 {strides = array<i32>} : memref<8x8x128xf32, #tpu.memory_space<vmem>>, vector<1x8x128xf32>,
    %c7_i32 = arith.constant 7 : i32
    %94 = arith.index_cast %c7_i32 : i32 to index
    %c0_39 = arith.constant 0 : index
    %c0_40 = arith.constant 0 : index
    %95 = vector.load %arg1[%94, %c0_39, %c0_40] : memref<8x8x128xf32, #tpu.memory_space<vmem>>, vector<1x8x128xf32>
    %96 = vector.shape_cast %95 : vector<1x8x128xf32> to vector<8x128xf32>
    %97 = arith.addf %89, %96 : vector<8x128xf32>
    %98 = arith.truncf %97 : vector<8x128xf32> to vector<8x128xbf16>
    %cst_41 = arith.constant dense<0.000000e+00> : vector<8x128xf32>
    %99 = tpu.matmul %98, %0, %cst_41 {dimension_numbers = #tpu.dot_dimension_numbers<[1], [0], [0], [1], [0, 0, 1, 1], [], []>} : vector<8x128xbf16>, vector<128x128xbf16>, vector<8x128xf32> -> vector<8x128xf32>
    %100 = vector.broadcast %1 : vector<1x128xf32> to vector<8x128xf32>
    %101 = arith.addf %99, %100 : vector<8x128xf32>
    %102 = math.tanh %101 : vector<8x128xf32>
    %103 = arith.index_cast %c7_i32 : i32 to index
    %c0_42 = arith.constant 0 : index
    %c0_43 = arith.constant 0 : index
    %104 = vector.load %arg5[%103, %c0_42, %c0_43] : memref<8x8x128xf32, #tpu.memory_space<vmem>>, vector<1x8x128xf32>
    %105 = vector.shape_cast %104 : vector<1x8x128xf32> to vector<8x128xf32>
    %106 = vector.shape_cast %102 : vector<8x128xf32> to vector<1x8x128xf32>
    tpu.vector_store %arg5[%103, %c0_42, %c0_43], %106 {strides = array<i32>} : memref<8x8x128xf32, #tpu.memory_space<vmem>>, vector<1x8x128xf32>,
    %c8_i32 = arith.constant 8 : i32
    return
  }
  func.func @transform_0(%arg0: i32) -> (i32, i32, i32) {
    %c0_i32 = arith.constant 0 : i32
    %c0_i32_0 = arith.constant 0 : i32
    %c0_i32_1 = arith.constant 0 : i32
    %c0_i32_2 = arith.constant 0 : i32
    return %c0_i32, %c0_i32_0, %c0_i32_1 : i32, i32, i32
  }
  func.func @transform_1(%arg0: i32) -> (i32, i32) {
    %c0_i32 = arith.constant 0 : i32
    %c0_i32_0 = arith.constant 0 : i32
    %c0_i32_1 = arith.constant 0 : i32
    return %c0_i32, %c0_i32_0 : i32, i32
  }
  func.func @transform_2(%arg0: i32) -> (i32, i32) {
    %c0_i32 = arith.constant 0 : i32
    %c0_i32_0 = arith.constant 0 : i32
    %c0_i32_1 = arith.constant 0 : i32
    return %c0_i32, %c0_i32_0 : i32, i32
  }
  func.func @transform_3(%arg0: i32) -> (i32, i32) {
    %c0_i32 = arith.constant 0 : i32
    %c0_i32_0 = arith.constant 0 : i32
    %c0_i32_1 = arith.constant 0 : i32
    return %c0_i32, %c0_i32_0 : i32, i32
  }
  func.func @transform_4(%arg0: i32) -> (i32, i32, i32) {
    %c0_i32 = arith.constant 0 : i32
    %c0_i32_0 = arith.constant 0 : i32
    %c0_i32_1 = arith.constant 0 : i32
    %c0_i32_2 = arith.constant 0 : i32
    return %c0_i32, %c0_i32_0, %c0_i32_1 : i32, i32, i32
  }
}

</mosaic_0001>

<llo_original>
// kernel: rnn_tbptt_forward_seq.1
$region0: #{rnn_tbptt_forward_seq.1}
  #allocation0 [shape = 'u32[]', space=smem, size = 0x4, offset = 0x4, fixed_abs, tag = 'smem constant byte address 0x4 - core index']
  #allocation1 [shape = 'u32[144,128]{1,0:T(1,128)}', space=vmem, size = 0x12000, scoped, tag = 'internal scratch']
  %s0 = inlined_call_operand.vmem [shape: f32[8,8,128], index: 0, kind: input, shape index: {}]
  %s1 = inlined_call_operand.vmem [shape: f32[8,128], index: 1, kind: input, shape index: {}]
  %s2 = inlined_call_operand.vmem [shape: bf16[128,128], index: 2, kind: input, shape index: {}]
  %s3 = inlined_call_operand.vmem [shape: f32[1,128], index: 3, kind: input, shape index: {}]
  %s4 = inlined_call_operand.vmem [shape: f32[8,8,128], index: 4, kind: output, shape index: {}]
  %s5 = sld [smem:[#allocation0]]
  $region26: #{rnn_tbptt_forward_seq.1} parent=0
    _
  %s7 = ssub.s32 1, %s5
  %s8 = scalar_select 0, %s7, %s5
  // Predicated region
  $region2: #{rnn_tbptt_forward_seq.1} parent=0 // pred_check
    _
  $region3: #{rnn_tbptt_forward_seq.1} parent=0 // pred_check_branch
    %10 = sbr.rel (0) target = $region5
  $region4: #{rnn_tbptt_forward_seq.1} parent=0 // pred_region
    _
  $region5: #{rnn_tbptt_forward_seq.1} parent=0 // pred_fallthru
    _
  // Predicated region
  $region6: #{rnn_tbptt_forward_seq.1} parent=0 // pred_check
    _
  $region7: #{rnn_tbptt_forward_seq.1} parent=0 // pred_check_branch
    %12 = sbr.rel (0) target = $region9
  $region8: #{rnn_tbptt_forward_seq.1} parent=0 // pred_region
    _
  $region9: #{rnn_tbptt_forward_seq.1} parent=0 // pred_fallthru
    _
  // Predicated region
  $region10: #{rnn_tbptt_forward_seq.1} parent=0 // pred_check
    _
  $region11: #{rnn_tbptt_forward_seq.1} parent=0 // pred_check_branch
    %14 = sbr.rel (0) target = $region13
  $region12: #{rnn_tbptt_forward_seq.1} parent=0 // pred_region
    _
  $region13: #{rnn_tbptt_forward_seq.1} parent=0 // pred_fallthru
    _
  // Predicated region
  $region14: #{rnn_tbptt_forward_seq.1} parent=0 // pred_check
    _
  $region15: #{rnn_tbptt_forward_seq.1} parent=0 // pred_check_branch
    %16 = sbr.rel (0) target = $region17
  $region16: #{rnn_tbptt_forward_seq.1} parent=0 // pred_region
    _
  $region17: #{rnn_tbptt_forward_seq.1} parent=0 // pred_fallthru
    _
  %v18 = vld [vmem:[%s2] sm:$0xf]
  %v19 = vld [vmem:[%s2 + $0x4] sm:$0xf]
  %v20 = vld [vmem:[%s2 + $0x8] sm:$0xf]
  %v21 = vld [vmem:[%s2 + $0xc] sm:$0xf]
  %v22 = vld [vmem:[%s2 + $0x10] sm:$0xf]
  %v23 = vld [vmem:[%s2 + $0x14] sm:$0xf]
  %v24 = vld [vmem:[%s2 + $0x18] sm:$0xf]
  %v25 = vld [vmem:[%s2 + $0x1c] sm:$0xf]
  %v26 = vld [vmem:[%s2 + $0x20] sm:$0xf]
  %v27 = vld [vmem:[%s2 + $0x24] sm:$0xf]
  %v28 = vld [vmem:[%s2 + $0x28] sm:$0xf]
  %v29 = vld [vmem:[%s2 + $0x2c] sm:$0xf]
  %v30 = vld [vmem:[%s2 + $0x30] sm:$0xf]
  %v31 = vld [vmem:[%s2 + $0x34] sm:$0xf]
  %v32 = vld [vmem:[%s2 + $0x38] sm:$0xf]
  %v33 = vld [vmem:[%s2 + $0x3c] sm:$0xf]
  %v34 = vld [vmem:[%s3] sm:$0x1]
  %v35 = vld [vmem:[%s1] sm:$0xff]
  %v36 = vld [vmem:[%s0] sm:$0xff]
  %v37 = vadd.f32 %v35, %v36
  %v38 = vpack.c.bf16 %v37, %v37
  %v40 = vlaneseq
  %v41 = vshrl.u32 %v40, 7
  %v42 = vsub.s32 0, %v41
  %v43 = vrot.slane %v34, %v42
  %v61 = vunpack.c.l.b16 %v18
  %v62 = vunpack.c.l.b16 %v19
  %v63 = vunpack.c.l.b16 %v20
  %v64 = vunpack.c.l.b16 %v21
  %v65 = vunpack.c.l.b16 %v22
  %v66 = vunpack.c.l.b16 %v23
  %v67 = vunpack.c.l.b16 %v24
  %v68 = vunpack.c.l.b16 %v25
  %v69 = vunpack.c.l.b16 %v26
  %v70 = vunpack.c.l.b16 %v27
  %v71 = vunpack.c.l.b16 %v28
  %v72 = vunpack.c.l.b16 %v29
  %v73 = vunpack.c.l.b16 %v30
  %v74 = vunpack.c.l.b16 %v31
  %v75 = vunpack.c.l.b16 %v32
  %v76 = vunpack.c.l.b16 %v33
  %v77 = vpack.c.b16 %v62, %v61
  %v78 = vpack.c.b16 %v64, %v63
  %v79 = vpack.c.b16 %v66, %v65
  %v80 = vpack.c.b16 %v68, %v67
  %v81 = vpack.c.b16 %v70, %v69
  %v82 = vpack.c.b16 %v72, %v71
  %v83 = vpack.c.b16 %v74, %v73
  %v84 = vpack.c.b16 %v76, %v75
  %93 = vmatprep.subr.bf16.mxu0 0
  %94 = vmatpush1.bf16.msra.mxu0 %v84
  %95 = vmatprep.subr.bf16.mxu0 0
  %96 = vmatpush1.bf16.msra.mxu0 %v83
  %97 = vmatprep.subr.bf16.mxu0 0
  %98 = vmatpush1.bf16.msra.mxu0 %v82
  %99 = vmatprep.subr.bf16.mxu0 0
  %100 = vmatpush1.bf16.msra.mxu0 %v81
  %101 = vmatprep.subr.bf16.mxu0 0
  %102 = vmatpush1.bf16.msra.mxu0 %v80
  %103 = vmatprep.subr.bf16.mxu0 0
  %104 = vmatpush1.bf16.msra.mxu0 %v79
  %105 = vmatprep.subr.bf16.mxu0 0
  %106 = vmatpush1.bf16.msra.mxu0 %v78
  %107 = vmatprep.subr.bf16.mxu0 0
  %108 = vmatpush1.bf16.msra.mxu0 %v77
  %109 = vmatprep.subr.bf16.mxu0 0
  %110 = vmatpush2.bf16.msra.mxu0 0
  %111 = vmatprep.subr.bf16.mxu0 0
  %112 = vmatpush2.bf16.msra.mxu0 0
  %113 = vmatprep.subr.bf16.mxu0 0
  %114 = vmatpush2.bf16.msra.mxu0 0
  %115 = vmatprep.subr.bf16.mxu0 0
  %116 = vmatpush2.bf16.msra.mxu0 0
  %117 = vmatprep.subr.bf16.mxu0 0
  %118 = vmatpush2.bf16.msra.mxu0 0
  %119 = vmatprep.subr.bf16.mxu0 0
  %120 = vmatpush2.bf16.msra.mxu0 0
  %121 = vmatprep.subr.bf16.mxu0 0
  %122 = vmatpush2.bf16.msra.mxu0 0
  %123 = vmatprep.subr.bf16.mxu0 0
  %124 = vmatpush2.bf16.msra.mxu0 0
  %125 = vmatprep.mubr.bf16.mxu0 0
  %126 = vmatmul.mubr.bf16.gmra.mxu0 %v38
  %v127 = vpop.f32.mrf.mxu0
  %v128 = vadd.f32 %v43, %v127
  %v129 = vpop.f32.mrf.mxu0
  %v130 = vpop.f32.mrf.mxu0
  %v131 = vpop.f32.mrf.mxu0
  %132 = vdwg.mxu0
  %v133 = vtanh.pop %v128
  %134 = vst [vmem:[%s4] sm:$0xff] %v133
  %s135 = scalar_lea.vmem %s0, 8
  %v136 = vld [vmem:[%s135] sm:$0xff]
  %v137 = vadd.f32 %v133, %v136
  %v138 = vpack.c.bf16 %v137, %v137
  %139 = vmatprep.subr.bf16.mxu0 0
  %140 = vmatpush1.bf16.msra.mxu0 %v84
  %141 = vmatprep.subr.bf16.mxu0 0
  %142 = vmatpush1.bf16.msra.mxu0 %v83
  %143 = vmatprep.subr.bf16.mxu0 0
  %144 = vmatpush1.bf16.msra.mxu0 %v82
  %145 = vmatprep.subr.bf16.mxu0 0
  %146 = vmatpush1.bf16.msra.mxu0 %v81
  %147 = vmatprep.subr.bf16.mxu0 0
  %148 = vmatpush1.bf16.msra.mxu0 %v80
  %149 = vmatprep.subr.bf16.mxu0 0
  %150 = vmatpush1.bf16.msra.mxu0 %v79
  %151 = vmatprep.subr.bf16.mxu0 0
  %152 = vmatpush1.bf16.msra.mxu0 %v78
  %153 = vmatprep.subr.bf16.mxu0 0
  %154 = vmatpush1.bf16.msra.mxu0 %v77
  %155 = vmatprep.subr.bf16.mxu0 0
  %156 = vmatpush2.bf16.msra.mxu0 0
  %157 = vmatprep.subr.bf16.mxu0 0
  %158 = vmatpush2.bf16.msra.mxu0 0
  %159 = vmatprep.subr.bf16.mxu0 0
  %160 = vmatpush2.bf16.msra.mxu0 0
  %161 = vmatprep.subr.bf16.mxu0 0
  %162 = vmatpush2.bf16.msra.mxu0 0
  %163 = vmatprep.subr.bf16.mxu0 0
  %164 = vmatpush2.bf16.msra.mxu0 0
  %165 = vmatprep.subr.bf16.mxu0 0
  %166 = vmatpush2.bf16.msra.mxu0 0
  %167 = vmatprep.subr.bf16.mxu0 0
  %168 = vmatpush2.bf16.msra.mxu0 0
  %169 = vmatprep.subr.bf16.mxu0 0
  %170 = vmatpush2.bf16.msra.mxu0 0
  %171 = vmatprep.mubr.bf16.mxu0 0
  %172 = vmatmul.mubr.bf16.gmra.mxu0 %v138
  %v173 = vpop.f32.mrf.mxu0
  %v174 = vadd.f32 %v43, %v173
  %v175 = vpop.f32.mrf.mxu0
  %v176 = vpop.f32.mrf.mxu0
  %v177 = vpop.f32.mrf.mxu0
  %178 = vdwg.mxu0
  %v179 = vtanh.pop %v174
  %s180 = scalar_lea.vmem %s4, 8
  %181 = vst [vmem:[%s180] sm:$0xff] %v179
  %s182 = scalar_lea.vmem %s0, 16
  %v183 = vld [vmem:[%s182] sm:$0xff]
  %v184 = vadd.f32 %v179, %v183
  %v185 = vpack.c.bf16 %v184, %v184
  %186 = vmatprep.subr.bf16.mxu0 0
  %187 = vmatpush1.bf16.msra.mxu0 %v84
  %188 = vmatprep.subr.bf16.mxu0 0
  %189 = vmatpush1.bf16.msra.mxu0 %v83
  %190 = vmatprep.subr.bf16.mxu0 0
  %191 = vmatpush1.bf16.msra.mxu0 %v82
  %192 = vmatprep.subr.bf16.mxu0 0
  %193 = vmatpush1.bf16.msra.mxu0 %v81
  %194 = vmatprep.subr.bf16.mxu0 0
  %195 = vmatpush1.bf16.msra.mxu0 %v80
  %196 = vmatprep.subr.bf16.mxu0 0
  %197 = vmatpush1.bf16.msra.mxu0 %v79
  %198 = vmatprep.subr.bf16.mxu0 0
  %199 = vmatpush1.bf16.msra.mxu0 %v78
  %200 = vmatprep.subr.bf16.mxu0 0
  %201 = vmatpush1.bf16.msra.mxu0 %v77
  %202 = vmatprep.subr.bf16.mxu0 0
  %203 = vmatpush2.bf16.msra.mxu0 0
  %204 = vmatprep.subr.bf16.mxu0 0
  %205 = vmatpush2.bf16.msra.mxu0 0
  %206 = vmatprep.subr.bf16.mxu0 0
  %207 = vmatpush2.bf16.msra.mxu0 0
  %208 = vmatprep.subr.bf16.mxu0 0
  %209 = vmatpush2.bf16.msra.mxu0 0
  %210 = vmatprep.subr.bf16.mxu0 0
  %211 = vmatpush2.bf16.msra.mxu0 0
  %212 = vmatprep.subr.bf16.mxu0 0
  %213 = vmatpush2.bf16.msra.mxu0 0
  %214 = vmatprep.subr.bf16.mxu0 0
  %215 = vmatpush2.bf16.msra.mxu0 0
  %216 = vmatprep.subr.bf16.mxu0 0
  %217 = vmatpush2.bf16.msra.mxu0 0
  %218 = vmatprep.mubr.bf16.mxu0 0
  %219 = vmatmul.mubr.bf16.gmra.mxu0 %v185
  %v220 = vpop.f32.mrf.mxu0
  %v221 = vadd.f32 %v43, %v220
  %v222 = vpop.f32.mrf.mxu0
  %v223 = vpop.f32.mrf.mxu0
  %v224 = vpop.f32.mrf.mxu0
  %225 = vdwg.mxu0
  %v226 = vtanh.pop %v221
  %s227 = scalar_lea.vmem %s4, 16
  %228 = vst [vmem:[%s227] sm:$0xff] %v226
  %s229 = scalar_lea.vmem %s0, 24
  %v230 = vld [vmem:[%s229] sm:$0xff]
  %v231 = vadd.f32 %v226, %v230
  %v232 = vpack.c.bf16 %v231, %v231
  %233 = vmatprep.subr.bf16.mxu0 0
  %234 = vmatpush1.bf16.msra.mxu0 %v84
  %235 = vmatprep.subr.bf16.mxu0 0
  %236 = vmatpush1.bf16.msra.mxu0 %v83
  %237 = vmatprep.subr.bf16.mxu0 0
  %238 = vmatpush1.bf16.msra.mxu0 %v82
  %239 = vmatprep.subr.bf16.mxu0 0
  %240 = vmatpush1.bf16.msra.mxu0 %v81
  %241 = vmatprep.subr.bf16.mxu0 0
  %242 = vmatpush1.bf16.msra.mxu0 %v80
  %243 = vmatprep.subr.bf16.mxu0 0
  %244 = vmatpush1.bf16.msra.mxu0 %v79
  %245 = vmatprep.subr.bf16.mxu0 0
  %246 = vmatpush1.bf16.msra.mxu0 %v78
  %247 = vmatprep.subr.bf16.mxu0 0
  %248 = vmatpush1.bf16.msra.mxu0 %v77
  %249 = vmatprep.subr.bf16.mxu0 0
  %250 = vmatpush2.bf16.msra.mxu0 0
  %251 = vmatprep.subr.bf16.mxu0 0
  %252 = vmatpush2.bf16.msra.mxu0 0
  %253 = vmatprep.subr.bf16.mxu0 0
  %254 = vmatpush2.bf16.msra.mxu0 0
  %255 = vmatprep.subr.bf16.mxu0 0
  %256 = vmatpush2.bf16.msra.mxu0 0
  %257 = vmatprep.subr.bf16.mxu0 0
  %258 = vmatpush2.bf16.msra.mxu0 0
  %259 = vmatprep.subr.bf16.mxu0 0
  %260 = vmatpush2.bf16.msra.mxu0 0
  %261 = vmatprep.subr.bf16.mxu0 0
  %262 = vmatpush2.bf16.msra.mxu0 0
  %263 = vmatprep.subr.bf16.mxu0 0
  %264 = vmatpush2.bf16.msra.mxu0 0
  %265 = vmatprep.mubr.bf16.mxu0 0
  %266 = vmatmul.mubr.bf16.gmra.mxu0 %v232
  %v267 = vpop.f32.mrf.mxu0
  %v268 = vadd.f32 %v43, %v267
  %v269 = vpop.f32.mrf.mxu0
  %v270 = vpop.f32.mrf.mxu0
  %v271 = vpop.f32.mrf.mxu0
  %272 = vdwg.mxu0
  %v273 = vtanh.pop %v268
  %s274 = scalar_lea.vmem %s4, 24
  %275 = vst [vmem:[%s274] sm:$0xff] %v273
  %s276 = scalar_lea.vmem %s0, 32
  %v277 = vld [vmem:[%s276] sm:$0xff]
  %v278 = vadd.f32 %v273, %v277
  %v279 = vpack.c.bf16 %v278, %v278
  %280 = vmatprep.subr.bf16.mxu0 0
  %281 = vmatpush1.bf16.msra.mxu0 %v84
  %282 = vmatprep.subr.bf16.mxu0 0
  %283 = vmatpush1.bf16.msra.mxu0 %v83
  %284 = vmatprep.subr.bf16.mxu0 0
  %285 = vmatpush1.bf16.msra.mxu0 %v82
  %286 = vmatprep.subr.bf16.mxu0 0
  %287 = vmatpush1.bf16.msra.mxu0 %v81
  %288 = vmatprep.subr.bf16.mxu0 0
  %289 = vmatpush1.bf16.msra.mxu0 %v80
  %290 = vmatprep.subr.bf16.mxu0 0
  %291 = vmatpush1.bf16.msra.mxu0 %v79
  %292 = vmatprep.subr.bf16.mxu0 0
  %293 = vmatpush1.bf16.msra.mxu0 %v78
  %294 = vmatprep.subr.bf16.mxu0 0
  %295 = vmatpush1.bf16.msra.mxu0 %v77
  %296 = vmatprep.subr.bf16.mxu0 0
  %297 = vmatpush2.bf16.msra.mxu0 0
  %298 = vmatprep.subr.bf16.mxu0 0
  %299 = vmatpush2.bf16.msra.mxu0 0
  %300 = vmatprep.subr.bf16.mxu0 0
  %301 = vmatpush2.bf16.msra.mxu0 0
  %302 = vmatprep.subr.bf16.mxu0 0
  %303 = vmatpush2.bf16.msra.mxu0 0
  %304 = vmatprep.subr.bf16.mxu0 0
  %305 = vmatpush2.bf16.msra.mxu0 0
  %306 = vmatprep.subr.bf16.mxu0 0
  %307 = vmatpush2.bf16.msra.mxu0 0
  %308 = vmatprep.subr.bf16.mxu0 0
  %309 = vmatpush2.bf16.msra.mxu0 0
  %310 = vmatprep.subr.bf16.mxu0 0
  %311 = vmatpush2.bf16.msra.mxu0 0
  %312 = vmatprep.mubr.bf16.mxu0 0
  %313 = vmatmul.mubr.bf16.gmra.mxu0 %v279
  %v314 = vpop.f32.mrf.mxu0
  %v315 = vadd.f32 %v43, %v314
  %v316 = vpop.f32.mrf.mxu0
  %v317 = vpop.f32.mrf.mxu0
  %v318 = vpop.f32.mrf.mxu0
  %319 = vdwg.mxu0
  %v320 = vtanh.pop %v315
  %s321 = scalar_lea.vmem %s4, 32
  %322 = vst [vmem:[%s321] sm:$0xff] %v320
  %s323 = scalar_lea.vmem %s0, 40
  %v324 = vld [vmem:[%s323] sm:$0xff]
  %v325 = vadd.f32 %v320, %v324
  %v326 = vpack.c.bf16 %v325, %v325
  %327 = vmatprep.subr.bf16.mxu0 0
  %328 = vmatpush1.bf16.msra.mxu0 %v84
  %329 = vmatprep.subr.bf16.mxu0 0
  %330 = vmatpush1.bf16.msra.mxu0 %v83
  %331 = vmatprep.subr.bf16.mxu0 0
  %332 = vmatpush1.bf16.msra.mxu0 %v82
  %333 = vmatprep.subr.bf16.mxu0 0
  %334 = vmatpush1.bf16.msra.mxu0 %v81
  %335 = vmatprep.subr.bf16.mxu0 0
  %336 = vmatpush1.bf16.msra.mxu0 %v80
  %337 = vmatprep.subr.bf16.mxu0 0
  %338 = vmatpush1.bf16.msra.mxu0 %v79
  %339 = vmatprep.subr.bf16.mxu0 0
  %340 = vmatpush1.bf16.msra.mxu0 %v78
  %341 = vmatprep.subr.bf16.mxu0 0
  %342 = vmatpush1.bf16.msra.mxu0 %v77
  %343 = vmatprep.subr.bf16.mxu0 0
  %344 = vmatpush2.bf16.msra.mxu0 0
  %345 = vmatprep.subr.bf16.mxu0 0
  %346 = vmatpush2.bf16.msra.mxu0 0
  %347 = vmatprep.subr.bf16.mxu0 0
  %348 = vmatpush2.bf16.msra.mxu0 0
  %349 = vmatprep.subr.bf16.mxu0 0
  %350 = vmatpush2.bf16.msra.mxu0 0
  %351 = vmatprep.subr.bf16.mxu0 0
  %352 = vmatpush2.bf16.msra.mxu0 0
  %353 = vmatprep.subr.bf16.mxu0 0
  %354 = vmatpush2.bf16.msra.mxu0 0
  %355 = vmatprep.subr.bf16.mxu0 0
  %356 = vmatpush2.bf16.msra.mxu0 0
  %357 = vmatprep.subr.bf16.mxu0 0
  %358 = vmatpush2.bf16.msra.mxu0 0
  %359 = vmatprep.mubr.bf16.mxu0 0
  %360 = vmatmul.mubr.bf16.gmra.mxu0 %v326
  %v361 = vpop.f32.mrf.mxu0
  %v362 = vadd.f32 %v43, %v361
  %v363 = vpop.f32.mrf.mxu0
  %v364 = vpop.f32.mrf.mxu0
  %v365 = vpop.f32.mrf.mxu0
  %366 = vdwg.mxu0
  %v367 = vtanh.pop %v362
  %s368 = scalar_lea.vmem %s4, 40
  %369 = vst [vmem:[%s368] sm:$0xff] %v367
  %s370 = scalar_lea.vmem %s0, 48
  %v371 = vld [vmem:[%s370] sm:$0xff]
  %v372 = vadd.f32 %v367, %v371
  %v373 = vpack.c.bf16 %v372, %v372
  %374 = vmatprep.subr.bf16.mxu0 0
  %375 = vmatpush1.bf16.msra.mxu0 %v84
  %376 = vmatprep.subr.bf16.mxu0 0
  %377 = vmatpush1.bf16.msra.mxu0 %v83
  %378 = vmatprep.subr.bf16.mxu0 0
  %379 = vmatpush1.bf16.msra.mxu0 %v82
  %380 = vmatprep.subr.bf16.mxu0 0
  %381 = vmatpush1.bf16.msra.mxu0 %v81
  %382 = vmatprep.subr.bf16.mxu0 0
  %383 = vmatpush1.bf16.msra.mxu0 %v80
  %384 = vmatprep.subr.bf16.mxu0 0
  %385 = vmatpush1.bf16.msra.mxu0 %v79
  %386 = vmatprep.subr.bf16.mxu0 0
  %387 = vmatpush1.bf16.msra.mxu0 %v78
  %388 = vmatprep.subr.bf16.mxu0 0
  %389 = vmatpush1.bf16.msra.mxu0 %v77
  %390 = vmatprep.subr.bf16.mxu0 0
  %391 = vmatpush2.bf16.msra.mxu0 0
  %392 = vmatprep.subr.bf16.mxu0 0
  %393 = vmatpush2.bf16.msra.mxu0 0
  %394 = vmatprep.subr.bf16.mxu0 0
  %395 = vmatpush2.bf16.msra.mxu0 0
  %396 = vmatprep.subr.bf16.mxu0 0
  %397 = vmatpush2.bf16.msra.mxu0 0
  %398 = vmatprep.subr.bf16.mxu0 0
  %399 = vmatpush2.bf16.msra.mxu0 0
  %400 = vmatprep.subr.bf16.mxu0 0
  %401 = vmatpush2.bf16.msra.mxu0 0
  %402 = vmatprep.subr.bf16.mxu0 0
  %403 = vmatpush2.bf16.msra.mxu0 0
  %404 = vmatprep.subr.bf16.mxu0 0
  %405 = vmatpush2.bf16.msra.mxu0 0
  %406 = vmatprep.mubr.bf16.mxu0 0
  %407 = vmatmul.mubr.bf16.gmra.mxu0 %v373
  %v408 = vpop.f32.mrf.mxu0
  %v409 = vadd.f32 %v43, %v408
  %v410 = vpop.f32.mrf.mxu0
  %v411 = vpop.f32.mrf.mxu0
  %v412 = vpop.f32.mrf.mxu0
  %413 = vdwg.mxu0
  %v414 = vtanh.pop %v409
  %s415 = scalar_lea.vmem %s4, 48
  %416 = vst [vmem:[%s415] sm:$0xff] %v414
  %s417 = scalar_lea.vmem %s0, 56
  %v418 = vld [vmem:[%s417] sm:$0xff]
  %v419 = vadd.f32 %v414, %v418
  %v420 = vpack.c.bf16 %v419, %v419
  %421 = vmatprep.subr.bf16.mxu0 0
  %422 = vmatpush1.bf16.msra.mxu0 %v84
  %423 = vmatprep.subr.bf16.mxu0 0
  %424 = vmatpush1.bf16.msra.mxu0 %v83
  %425 = vmatprep.subr.bf16.mxu0 0
  %426 = vmatpush1.bf16.msra.mxu0 %v82
  %427 = vmatprep.subr.bf16.mxu0 0
  %428 = vmatpush1.bf16.msra.mxu0 %v81
  %429 = vmatprep.subr.bf16.mxu0 0
  %430 = vmatpush1.bf16.msra.mxu0 %v80
  %431 = vmatprep.subr.bf16.mxu0 0
  %432 = vmatpush1.bf16.msra.mxu0 %v79
  %433 = vmatprep.subr.bf16.mxu0 0
  %434 = vmatpush1.bf16.msra.mxu0 %v78
  %435 = vmatprep.subr.bf16.mxu0 0
  %436 = vmatpush1.bf16.msra.mxu0 %v77
  %437 = vmatprep.subr.bf16.mxu0 0
  %438 = vmatpush2.bf16.msra.mxu0 0
  %439 = vmatprep.subr.bf16.mxu0 0
  %440 = vmatpush2.bf16.msra.mxu0 0
  %441 = vmatprep.subr.bf16.mxu0 0
  %442 = vmatpush2.bf16.msra.mxu0 0
  %443 = vmatprep.subr.bf16.mxu0 0
  %444 = vmatpush2.bf16.msra.mxu0 0
  %445 = vmatprep.subr.bf16.mxu0 0
  %446 = vmatpush2.bf16.msra.mxu0 0
  %447 = vmatprep.subr.bf16.mxu0 0
  %448 = vmatpush2.bf16.msra.mxu0 0
  %449 = vmatprep.subr.bf16.mxu0 0
  %450 = vmatpush2.bf16.msra.mxu0 0
  %451 = vmatprep.subr.bf16.mxu0 0
  %452 = vmatpush2.bf16.msra.mxu0 0
  %453 = vmatprep.mubr.bf16.mxu0 0
  %454 = vmatmul.mubr.bf16.gmra.mxu0 %v420
  %v455 = vpop.f32.mrf.mxu0
  %v456 = vadd.f32 %v43, %v455
  %v457 = vpop.f32.mrf.mxu0
  %v458 = vpop.f32.mrf.mxu0
  %v459 = vpop.f32.mrf.mxu0
  %460 = vdwg.mxu0
  %v461 = vtanh.pop %v456
  %s462 = scalar_lea.vmem %s4, 56
  %463 = vst [vmem:[%s462] sm:$0xff] %v461
  // Predicated region
  $region18: #{rnn_tbptt_forward_seq.1} parent=0 // pred_check
    _
  $region19: #{rnn_tbptt_forward_seq.1} parent=0 // pred_check_branch
    %465 = sbr.rel (0) target = $region21
  $region20: #{rnn_tbptt_forward_seq.1} parent=0 // pred_region
    _
  $region21: #{rnn_tbptt_forward_seq.1} parent=0 // pred_fallthru
    _
  // Predicated region
  $region22: #{rnn_tbptt_forward_seq.1} parent=0 // pred_check
    _
  $region23: #{rnn_tbptt_forward_seq.1} parent=0 // pred_check_branch
    %467 = sbr.rel (0) target = $region25
  $region24: #{rnn_tbptt_forward_seq.1} parent=0 // pred_region
    _
  $region25: #{rnn_tbptt_forward_seq.1} parent=0 // pred_fallthru
    _

</llo_original>
